<compile_context>
chip_gen: v6e
topology: v6e:2x2x1
jax: 0.10.0
libtpu: 0.0.40
codegen_flags: <defaults>
</compile_context>

<pallas_src>
import functools

import jax
import jax.numpy as jnp
from jax.experimental import pallas as pl
from jax.experimental.pallas import tpu as pltpu

BN_EPS = 1e-5


def _round_up(x, m):
    return (x + m - 1) // m * m


def critic_kernel(state_ref, action_ref, mats_ref, vec_ref, out_ref, *,
                  state_size, action_size, fc1_units, fc2_units):
    S, A, F1, F2 = state_size, action_size, fc1_units, fc2_units

    # --- static offsets into the packed parameter slabs (128-lane aligned) ---
    seg = lambda n: _round_up(n, 128)
    o_gamma = 0
    o_beta = o_gamma + seg(S)
    o_b1 = o_beta + seg(S)
    o_b2 = o_b1 + seg(F1)
    o_w3 = o_b2 + seg(F2)
    o_b3 = o_w3 + seg(F2)

    gamma = vec_ref[:, o_gamma:o_gamma + S]        # (1, S)
    beta = vec_ref[:, o_beta:o_beta + S]           # (1, S)
    b1 = vec_ref[:, o_b1:o_b1 + F1]                # (1, F1)
    b2 = vec_ref[:, o_b2:o_b2 + F2]                # (1, F2)
    w3 = vec_ref[:, o_w3:o_w3 + F2]                # (1, F2)  fc3 weight row
    b3 = vec_ref[:, o_b3:o_b3 + 1]                 # (1, 1)

    s_pad = _round_up(S, 8)
    f1_pad = _round_up(F1, 8)
    w1 = mats_ref[0:S, 0:F1]                                   # (S,  F1)
    w2h = mats_ref[s_pad:s_pad + F1, 0:F2]                     # (F1, F2)
    w2a = mats_ref[s_pad + f1_pad:s_pad + f1_pad + A, 0:F2]    # (A,  F2)

    # --- BatchNorm1d (training mode: biased full-batch statistics) ---
    x = state_ref[...].astype(jnp.float32)         # (B, S)
    mean = jnp.mean(x, axis=0, keepdims=True)
    var = jnp.mean((x - mean) ** 2, axis=0, keepdims=True)
    xn = (x - mean) * jax.lax.rsqrt(var + BN_EPS)
    xn = xn * gamma + beta

    # --- fc1 + ReLU (MXU) ---
    h1 = jnp.dot(xn, w1, preferred_element_type=jnp.float32) + b1
    h1 = jnp.maximum(h1, 0.0)                      # (B, F1)

    # --- cat([h1, action]) @ W2  ==  h1 @ W2h + action @ W2a (MXU) ---
    a = action_ref[...].astype(jnp.float32)        # (B, A)
    h2 = (jnp.dot(h1, w2h, preferred_element_type=jnp.float32)
          + jnp.dot(a, w2a, preferred_element_type=jnp.float32)
          + b2)
    h2 = jnp.maximum(h2, 0.0)                      # (B, F2)

    # --- fc3 as VPU multiply + lane reduction (no degenerate N=1 matmul) ---
    out_ref[...] = jnp.sum(h2 * w3, axis=-1, keepdims=True) + b3   # (B, 1)


def critic_forward(state, action, packed):
    """Run the fused Critic forward. Returns Q-values of shape (B, 1)."""
    B, S = state.shape
    A = action.shape[1]
    F1 = packed["fc1_units"]
    F2 = packed["fc2_units"]

    kernel = functools.partial(
        critic_kernel,
        state_size=S, action_size=A, fc1_units=F1, fc2_units=F2)

    vmem = pl.BlockSpec(memory_space=pltpu.MemorySpace.VMEM)
    return pl.pallas_call(
        kernel,
        out_shape=jax.ShapeDtypeStruct((B, 1), jnp.float32),
        in_specs=[vmem, vmem, vmem, vmem],
        out_specs=vmem,
    )(state, action, packed["mats"], packed["vec"])


def init_params(key, state_size, action_size, fc1_units=128, fc2_units=64):
    """Deterministic init mirroring the PyTorch module's shapes/init ranges.

    weights_init() in the reference uses weight.size()[0] == out_features, so
    the fc1/fc2 weight range is 1/sqrt(out_features).  Biases keep PyTorch's
    default Linear init range 1/sqrt(in_features).  fc3 weight is +/-0.003.
    """
    ks = jax.random.split(key, 6)

    def u(k, shape, lim):
        return jax.random.uniform(k, shape, jnp.float32, minval=-lim, maxval=lim)

    w1_lim = 1.0 / jnp.sqrt(jnp.float32(fc1_units))
    w2_lim = 1.0 / jnp.sqrt(jnp.float32(fc2_units))
    b1_lim = 1.0 / jnp.sqrt(jnp.float32(state_size))
    b2_lim = 1.0 / jnp.sqrt(jnp.float32(fc1_units + action_size))
    b3_lim = 1.0 / jnp.sqrt(jnp.float32(fc2_units))

    # fc2 weight is (fc2_units, fc1_units + action_size) in torch; store it
    # transposed and split into the hidden part and the action part.
    w2_full = u(ks[2], (fc1_units + action_size, fc2_units), w2_lim)

    return {
        "gamma": jnp.ones((state_size,), jnp.float32),   # BN weight
        "beta": jnp.zeros((state_size,), jnp.float32),   # BN bias
        "w1": u(ks[0], (state_size, fc1_units), w1_lim),  # fc1.weight.T
        "b1": u(ks[1], (fc1_units,), b1_lim),
        "w2h": w2_full[:fc1_units, :],                    # fc2.weight.T (hidden)
        "w2a": w2_full[fc1_units:, :],                    # fc2.weight.T (action)
        "b2": u(ks[3], (fc2_units,), b2_lim),
        "w3": u(ks[4], (fc2_units,), 0.003),              # fc3.weight (as a row)
        "b3": u(ks[5], (), b3_lim),
    }


def pack_params(params, state_size, action_size, fc1_units=128, fc2_units=64):
    """Pack the parameters into two lane-dense slabs (fewer DMA descriptors).

    mats slab (rows x 128-multiple lanes), f32:
        rows [0:S)                 , lanes [0:F1)  : w1
        rows [S_pad : S_pad+F1)    , lanes [0:F2)  : w2h
        rows [S_pad+F1_pad : +A)   , lanes [0:F2)  : w2a
    vec slab (1, L), each segment 128-lane aligned:
        gamma | beta | b1 | b2 | w3 | b3
    """
    S, A, F1, F2 = state_size, action_size, fc1_units, fc2_units
    seg = lambda n: _round_up(n, 128)

    # vector slab
    o_gamma = 0
    o_beta = o_gamma + seg(S)
    o_b1 = o_beta + seg(S)
    o_b2 = o_b1 + seg(F1)
    o_w3 = o_b2 + seg(F2)
    o_b3 = o_w3 + seg(F2)
    vec_len = o_b3 + 128
    vec = jnp.zeros((1, vec_len), jnp.float32)
    vec = vec.at[0, o_gamma:o_gamma + S].set(params["gamma"])
    vec = vec.at[0, o_beta:o_beta + S].set(params["beta"])
    vec = vec.at[0, o_b1:o_b1 + F1].set(params["b1"])
    vec = vec.at[0, o_b2:o_b2 + F2].set(params["b2"])
    vec = vec.at[0, o_w3:o_w3 + F2].set(params["w3"])
    vec = vec.at[0, o_b3].set(params["b3"])

    # matrix slab
    s_pad = _round_up(S, 8)
    f1_pad = _round_up(F1, 8)
    lanes = _round_up(max(F1, F2), 128)
    rows = s_pad + f1_pad + A
    mats = jnp.zeros((rows, lanes), jnp.float32)
    mats = mats.at[0:S, 0:F1].set(params["w1"])
    mats = mats.at[s_pad:s_pad + F1, 0:F2].set(params["w2h"])
    mats = mats.at[s_pad + f1_pad:s_pad + f1_pad + A, 0:F2].set(params["w2a"])

    return {"mats": mats, "vec": vec, "fc1_units": F1, "fc2_units": F2}


if __name__ == "__main__":
    key = jax.random.PRNGKey(0)
    k_state, k_action, k_params = jax.random.split(key, 3)

    batch = 8
    ma_state_size = 32
    ma_action_size = 8

    state = jax.random.normal(k_state, (batch, ma_state_size), jnp.float32)
    action = jax.random.normal(k_action, (batch, ma_action_size), jnp.float32)
    nat = init_params(k_params, ma_state_size, ma_action_size)
    packed = pack_params(nat, ma_state_size, ma_action_size)

    q = critic_forward(state, action, packed)
    jax.block_until_ready(q)
    assert q.shape == (batch, 1) and q.dtype == jnp.float32

    # Pure-JAX reference check of the same math.
    mean = jnp.mean(state, axis=0, keepdims=True)
    var = jnp.mean((state - mean) ** 2, axis=0, keepdims=True)
    xn = (state - mean) / jnp.sqrt(var + BN_EPS) * nat["gamma"] + nat["beta"]
    h1 = jnp.maximum(xn @ nat["w1"] + nat["b1"], 0.0)
    cat = jnp.concatenate([h1, action], axis=1)
    w2 = jnp.concatenate([nat["w2h"], nat["w2a"]], axis=0)
    h2 = jnp.maximum(cat @ w2 + nat["b2"], 0.0)
    q_ref = h2 @ nat["w3"].reshape(-1, 1) + nat["b3"]
    assert jnp.allclose(q, q_ref, atol=1e-5, rtol=1e-5)

    print("KERNEL_OK")
</pallas_src>

<mosaic_0001>
module attributes {stable_mosaic.version = 11 : i64} {
  func.func @critic_kernel(%arg0: memref<8x32xf32, #tpu.memory_space<vmem>>, %arg1: memref<8x8xf32, #tpu.memory_space<vmem>>, %arg2: memref<168x128xf32, #tpu.memory_space<vmem>>, %arg3: memref<1x768xf32, #tpu.memory_space<vmem>>, %arg4: memref<8x1xf32, #tpu.memory_space<vmem>>) attributes {dimension_semantics = [], scalar_prefetch = 0 : i64, scratch_operands = 0 : i64, tpu.core_type = #tpu.core_type<tc>} {
    %c0 = arith.constant 0 : index
    %c0_0 = arith.constant 0 : index
    %0 = vector.load %arg3[%c0, %c0_0] : memref<1x768xf32, #tpu.memory_space<vmem>>, vector<1x32xf32>
    %c0_1 = arith.constant 0 : index
    %c128 = arith.constant 128 : index
    %1 = vector.load %arg3[%c0_1, %c128] : memref<1x768xf32, #tpu.memory_space<vmem>>, vector<1x32xf32>
    %c0_2 = arith.constant 0 : index
    %c256 = arith.constant 256 : index
    %2 = vector.load %arg3[%c0_2, %c256] : memref<1x768xf32, #tpu.memory_space<vmem>>, vector<1x128xf32>
    %c0_3 = arith.constant 0 : index
    %c384 = arith.constant 384 : index
    %3 = vector.load %arg3[%c0_3, %c384] : memref<1x768xf32, #tpu.memory_space<vmem>>, vector<1x64xf32>
    %c0_4 = arith.constant 0 : index
    %c512 = arith.constant 512 : index
    %4 = vector.load %arg3[%c0_4, %c512] : memref<1x768xf32, #tpu.memory_space<vmem>>, vector<1x64xf32>
    %c0_5 = arith.constant 0 : index
    %c640 = arith.constant 640 : index
    %5 = vector.load %arg3[%c0_5, %c640] : memref<1x768xf32, #tpu.memory_space<vmem>>, vector<1x1xf32>
    %c0_6 = arith.constant 0 : index
    %c0_7 = arith.constant 0 : index
    %6 = vector.load %arg2[%c0_6, %c0_7] : memref<168x128xf32, #tpu.memory_space<vmem>>, vector<32x128xf32>
    %c32 = arith.constant 32 : index
    %c0_8 = arith.constant 0 : index
    %7 = vector.load %arg2[%c32, %c0_8] : memref<168x128xf32, #tpu.memory_space<vmem>>, vector<128x64xf32>
    %c160 = arith.constant 160 : index
    %c0_9 = arith.constant 0 : index
    %8 = vector.load %arg2[%c160, %c0_9] : memref<168x128xf32, #tpu.memory_space<vmem>>, vector<8x64xf32>
    %c0_10 = arith.constant 0 : index
    %c0_11 = arith.constant 0 : index
    %9 = vector.load %arg0[%c0_10, %c0_11] : memref<8x32xf32, #tpu.memory_space<vmem>>, vector<8x32xf32>
    %cst = arith.constant dense<0.000000e+00> : vector<32xf32>
    %10 = vector.multi_reduction <add>, %9, %cst [0] : vector<8x32xf32> to vector<32xf32>
    %11 = vector.shape_cast %10 : vector<32xf32> to vector<1x32xf32>
    %cst_12 = arith.constant 8.000000e+00 : f32
    %12 = vector.broadcast %cst_12 : f32 to vector<1x32xf32>
    %13 = arith.divf %11, %12 : vector<1x32xf32>
    %14 = vector.broadcast %13 : vector<1x32xf32> to vector<8x32xf32>
    %15 = arith.subf %9, %14 : vector<8x32xf32>
    %16 = arith.mulf %15, %15 : vector<8x32xf32>
    %cst_13 = arith.constant dense<0.000000e+00> : vector<32xf32>
    %17 = vector.multi_reduction <add>, %16, %cst_13 [0] : vector<8x32xf32> to vector<32xf32>
    %18 = vector.shape_cast %17 : vector<32xf32> to vector<1x32xf32>
    %cst_14 = arith.constant 8.000000e+00 : f32
    %19 = vector.broadcast %cst_14 : f32 to vector<1x32xf32>
    %20 = arith.divf %18, %19 : vector<1x32xf32>
    %21 = vector.broadcast %13 : vector<1x32xf32> to vector<8x32xf32>
    %22 = arith.subf %9, %21 : vector<8x32xf32>
    %cst_15 = arith.constant 9.99999974E-6 : f32
    %23 = vector.broadcast %cst_15 : f32 to vector<1x32xf32>
    %24 = arith.addf %20, %23 : vector<1x32xf32>
    %25 = math.rsqrt %24 : vector<1x32xf32>
    %26 = vector.broadcast %25 : vector<1x32xf32> to vector<8x32xf32>
    %27 = arith.mulf %22, %26 : vector<8x32xf32>
    %28 = vector.broadcast %0 : vector<1x32xf32> to vector<8x32xf32>
    %29 = arith.mulf %27, %28 : vector<8x32xf32>
    %30 = vector.broadcast %1 : vector<1x32xf32> to vector<8x32xf32>
    %31 = arith.addf %29, %30 : vector<8x32xf32>
    %cst_16 = arith.constant dense<0.000000e+00> : vector<8x128xf32>
    %32 = tpu.matmul %31, %6, %cst_16 {dimension_numbers = #tpu.dot_dimension_numbers<[1], [0], [0], [1], [0, 0, 1, 1], [], []>} : vector<8x32xf32>, vector<32x128xf32>, vector<8x128xf32> -> vector<8x128xf32>
    %33 = vector.broadcast %2 : vector<1x128xf32> to vector<8x128xf32>
    %34 = arith.addf %32, %33 : vector<8x128xf32>
    %cst_17 = arith.constant 0.000000e+00 : f32
    %35 = vector.broadcast %cst_17 : f32 to vector<8x128xf32>
    %36 = arith.maximumf %34, %35 : vector<8x128xf32>
    %c0_18 = arith.constant 0 : index
    %c0_19 = arith.constant 0 : index
    %37 = vector.load %arg1[%c0_18, %c0_19] : memref<8x8xf32, #tpu.memory_space<vmem>>, vector<8x8xf32>
    %cst_20 = arith.constant dense<0.000000e+00> : vector<8x64xf32>
    %38 = tpu.matmul %36, %7, %cst_20 {dimension_numbers = #tpu.dot_dimension_numbers<[1], [0], [0], [1], [0, 0, 1, 1], [], []>} : vector<8x128xf32>, vector<128x64xf32>, vector<8x64xf32> -> vector<8x64xf32>
    %cst_21 = arith.constant dense<0.000000e+00> : vector<8x64xf32>
    %39 = tpu.matmul %37, %8, %cst_21 {dimension_numbers = #tpu.dot_dimension_numbers<[1], [0], [0], [1], [0, 0, 1, 1], [], []>} : vector<8x8xf32>, vector<8x64xf32>, vector<8x64xf32> -> vector<8x64xf32>
    %40 = arith.addf %38, %39 : vector<8x64xf32>
    %41 = vector.broadcast %3 : vector<1x64xf32> to vector<8x64xf32>
    %42 = arith.addf %40, %41 : vector<8x64xf32>
    %cst_22 = arith.constant 0.000000e+00 : f32
    %43 = vector.broadcast %cst_22 : f32 to vector<8x64xf32>
    %44 = arith.maximumf %42, %43 : vector<8x64xf32>
    %45 = vector.broadcast %4 : vector<1x64xf32> to vector<8x64xf32>
    %46 = arith.mulf %44, %45 : vector<8x64xf32>
    %cst_23 = arith.constant dense<0.000000e+00> : vector<8xf32>
    %47 = vector.multi_reduction <add>, %46, %cst_23 [1] : vector<8x64xf32> to vector<8xf32>
    %48 = vector.shape_cast %47 : vector<8xf32> to vector<8x1xf32>
    %49 = vector.broadcast %5 : vector<1x1xf32> to vector<8x1xf32>
    %50 = arith.addf %48, %49 : vector<8x1xf32>
    %c0_24 = arith.constant 0 : index
    %c0_25 = arith.constant 0 : index
    %51 = vector.load %arg4[%c0_24, %c0_25] : memref<8x1xf32, #tpu.memory_space<vmem>>, vector<8x1xf32>
    tpu.vector_store %arg4[%c0_24, %c0_25], %50 {strides = array<i32>} : memref<8x1xf32, #tpu.memory_space<vmem>>, vector<8x1xf32>,
    return
  }
}

</mosaic_0001>

<llo_original>
// kernel: tpu_custom_call.1
$region0: #{tpu_custom_call.1}
  #allocation0 [shape = 'u32[]', space=smem, size = 0x4, offset = 0x4, fixed_abs, tag = 'smem constant byte address 0x4 - core index']
  #allocation1 [shape = 'u32[144,128]{1,0:T(1,128)}', space=vmem, size = 0x12000, scoped, tag = 'internal scratch']
  %s0 = inlined_call_operand.hbm [shape: f32[8,32], index: 0, kind: input, shape index: {}]
  %s1 = inlined_call_operand.hbm [shape: f32[8,8], index: 1, kind: input, shape index: {}]
  %s2 = inlined_call_operand.hbm [shape: f32[168,128], index: 2, kind: input, shape index: {}]
  %s3 = inlined_call_operand.hbm [shape: f32[1,768], index: 3, kind: input, shape index: {}]
  %s4 = inlined_call_operand.vmem [shape: f32[8,1], index: 4, kind: output, shape index: {}]
  %s5 = sld [smem:[#allocation0]]
  $region42: #{tpu_custom_call.1} parent=0
    _
  %s7 = ssub.s32 1, %s5
  %s8 = scalar_select 0, %s7, %s5
  $region1: #{tpu_custom_call.1} parent=0
    #allocation2 [shape = 'u8[4096]{0}', space=vmem, size = 0x1000, scoped, tag = 'input window, operand 0, single buffered']
    #allocation3 [shape = 's32[1]{0}', space=sflag, size = 0x4, scoped, tag = 'scoped memory for tpu_custom_call.1']
    #allocation4 [shape = 'u8[4096]{0}', space=vmem, size = 0x1000, scoped, tag = 'input window, operand 1, single buffered']
    #allocation5 [shape = 's32[1]{0}', space=sflag, size = 0x4, scoped, tag = 'scoped memory for tpu_custom_call.1']
    #allocation6 [shape = 'u8[86016]{0}', space=vmem, size = 0x15000, scoped, tag = 'input window, operand 2, single buffered']
    #allocation7 [shape = 'u8[3072]{0}', space=vmem, size = 0xc00, scoped, tag = 'input window, operand 3, single buffered']
    #allocation8 [shape = 's32[1]{0}', space=sflag, size = 0x4, scoped, tag = 'scoped memory for tpu_custom_call.1']
    %9 = vsyncpa [#allocation3], 0
    %10 = vsyncpa [#allocation5], 0
    %11 = vsyncpa [#allocation8], 0
    // Predicated region
    $region2: #{tpu_custom_call.1} parent=1 // pred_check
      _
    $region3: #{tpu_custom_call.1} parent=1 // pred_check_branch
      %13 = sbr.rel (0) target = $region5
    $region4: #{tpu_custom_call.1} parent=1 // pred_region
      %s15 = ssub.s32 128, 128
      %16 = vsyncadd [#allocation3], %s15
      %s18 = sshll.u32 [#allocation2], 4
      %s19 = int_to_ptr.vmem [resolvable:$true] %s18
      %21 = dma.hbm_to_vmem [thread:$0]  %s0, 128, %s19, [#allocation3]
    $region5: #{tpu_custom_call.1} parent=1 // pred_fallthru
      _
    // Predicated region
    $region6: #{tpu_custom_call.1} parent=1 // pred_check
      _
    $region7: #{tpu_custom_call.1} parent=1 // pred_check_branch
      %23 = sbr.rel (0) target = $region9
    $region8: #{tpu_custom_call.1} parent=1 // pred_region
      %s25 = ssub.s32 128, 128
      %26 = vsyncadd [#allocation5], %s25
      %s28 = sshll.u32 [#allocation4], 4
      %s29 = int_to_ptr.vmem [resolvable:$true] %s28
      %31 = dma.hbm_to_vmem [thread:$0]  %s1, 128, %s29, [#allocation5]
    $region9: #{tpu_custom_call.1} parent=1 // pred_fallthru
      _
    // Predicated region
    $region10: #{tpu_custom_call.1} parent=1 // pred_check
      _
    $region11: #{tpu_custom_call.1} parent=1 // pred_check_branch
      %33 = sbr.rel (0) target = $region13
    $region12: #{tpu_custom_call.1} parent=1 // pred_region
      %s35 = ssub.s32 2688, 2688
      %36 = vsyncadd [#allocation5], %s35
      %s37 = sshll.u32 [#allocation6], 4
      %s38 = int_to_ptr.vmem [resolvable:$true] %s37
      %43 = dma.hbm_to_vmem [thread:$0]  %s2, 2688, %s38, [#allocation5], 128, 128, 8
    $region13: #{tpu_custom_call.1} parent=1 // pred_fallthru
      _
    // Predicated region
    $region14: #{tpu_custom_call.1} parent=1 // pred_check
      _
    $region15: #{tpu_custom_call.1} parent=1 // pred_check_branch
      %45 = sbr.rel (0) target = $region17
    $region16: #{tpu_custom_call.1} parent=1 // pred_region
      %s47 = ssub.s32 96, 96
      %48 = vsyncadd [#allocation8], %s47
      %s50 = sshll.u32 [#allocation7], 4
      %s51 = int_to_ptr.vmem [resolvable:$true] %s50
      %53 = dma.hbm_to_vmem [thread:$0]  %s3, 96, %s51, [#allocation8]
    $region17: #{tpu_custom_call.1} parent=1 // pred_fallthru
      _
    // Predicated region
    $region18: #{tpu_custom_call.1} parent=1 // pred_check
      _
    $region19: #{tpu_custom_call.1} parent=1 // pred_check_branch
      %55 = sbr.rel (0) target = $region21
    $region20: #{tpu_custom_call.1} parent=1 // pred_region
      %56 = dma.done [#allocation3], 128
    $region21: #{tpu_custom_call.1} parent=1 // pred_fallthru
      _
    // Predicated region
    $region22: #{tpu_custom_call.1} parent=1 // pred_check
      _
    $region23: #{tpu_custom_call.1} parent=1 // pred_check_branch
      %58 = sbr.rel (0) target = $region25
    $region24: #{tpu_custom_call.1} parent=1 // pred_region
      %59 = dma.done [#allocation5], 128
    $region25: #{tpu_custom_call.1} parent=1 // pred_fallthru
      _
    // Predicated region
    $region26: #{tpu_custom_call.1} parent=1 // pred_check
      _
    $region27: #{tpu_custom_call.1} parent=1 // pred_check_branch
      %61 = sbr.rel (0) target = $region29
    $region28: #{tpu_custom_call.1} parent=1 // pred_region
      %62 = dma.done [#allocation5], 2688
    $region29: #{tpu_custom_call.1} parent=1 // pred_fallthru
      _
    // Predicated region
    $region30: #{tpu_custom_call.1} parent=1 // pred_check
      _
    $region31: #{tpu_custom_call.1} parent=1 // pred_check_branch
      %64 = sbr.rel (0) target = $region33
    $region32: #{tpu_custom_call.1} parent=1 // pred_region
      %65 = dma.done [#allocation8], 96
    $region33: #{tpu_custom_call.1} parent=1 // pred_fallthru
      _
    %v66 = vld [vmem:[#allocation7] sm:$0x1]
    %v67 = vld [vmem:[#allocation7 + $0x1] sm:$0x1]
    %v68 = vld [vmem:[#allocation7 + $0x2] sm:$0x1]
    %v69 = vld [vmem:[#allocation7 + $0x3] sm:$0x1]
    %v70 = vld [vmem:[#allocation7 + $0x4] sm:$0x1]
    %v71 = vld [vmem:[#allocation7 + $0x5] sm:$0x1]
    %v72 = vld [vmem:[#allocation6] sm:$0xff]
    %v73 = vld [vmem:[#allocation6 + $0x8] sm:$0xff]
    %v74 = vld [vmem:[#allocation6 + $0x10] sm:$0xff]
    %v75 = vld [vmem:[#allocation6 + $0x18] sm:$0xff]
    %v76 = vld [vmem:[#allocation6 + $0x20] sm:$0xff]
    %v77 = vld [vmem:[#allocation6 + $0x28] sm:$0xff]
    %v78 = vld [vmem:[#allocation6 + $0x30] sm:$0xff]
    %v79 = vld [vmem:[#allocation6 + $0x38] sm:$0xff]
    %v80 = vld [vmem:[#allocation6 + $0x40] sm:$0xff]
    %v81 = vld [vmem:[#allocation6 + $0x48] sm:$0xff]
    %v82 = vld [vmem:[#allocation6 + $0x50] sm:$0xff]
    %v83 = vld [vmem:[#allocation6 + $0x58] sm:$0xff]
    %v84 = vld [vmem:[#allocation6 + $0x60] sm:$0xff]
    %v85 = vld [vmem:[#allocation6 + $0x68] sm:$0xff]
    %v86 = vld [vmem:[#allocation6 + $0x70] sm:$0xff]
    %v87 = vld [vmem:[#allocation6 + $0x78] sm:$0xff]
    %v88 = vld [vmem:[#allocation6 + $0x80] sm:$0xff]
    %v89 = vld [vmem:[#allocation6 + $0x88] sm:$0xff]
    %v90 = vld [vmem:[#allocation6 + $0x90] sm:$0xff]
    %v91 = vld [vmem:[#allocation6 + $0x98] sm:$0xff]
    %v92 = vld [vmem:[#allocation6 + $0xa0] sm:$0xff]
    %v93 = vld [vmem:[#allocation2] sm:$0xff]
    %vm94 = vcmask 261120
    %v95 = vsel %vm94, %v93, 0.0
    %v96 = vrot.slane %v95, 4
    %v97 = vadd.f32 %v95, %v96
    %v98 = vrot.slane %v97, 2
    %v99 = vadd.f32 %v97, %v98
    %v100 = vrot.slane %v99, 1
    %v101 = vadd.f32 %v99, %v100
    %v102 = vrcp.pop 8.0
    %v103 = vmul.f32 %v101, %v102
    %v104 = vsub.f32 %v93, %v103
    %v105 = vmul.f32 %v104, %v104
    %v106 = vsel %vm94, %v105, 0.0
    %v107 = vrot.slane %v106, 4
    %v108 = vadd.f32 %v106, %v107
    %v109 = vrot.slane %v108, 2
    %v110 = vadd.f32 %v108, %v109
    %v111 = vrot.slane %v110, 1
    %v112 = vadd.f32 %v110, %v111
    %v113 = vmul.f32 %v112, %v102
    %v114 = vadd.f32 %v113, 1e-05
    %v115 = vrsqrt.pop %v114
    %v116 = vmul.f32 %v104, %v115
    %v118 = vlaneseq
    %v119 = vshrl.u32 %v118, 7
    %v120 = vsub.s32 0, %v119
    %v121 = vrot.slane %v66, %v120
    %v123 = vmul.f32 %v116, %v121
    %v125 = vlaneseq
    %v126 = vshrl.u32 %v125, 7
    %v127 = vsub.s32 0, %v126
    %v128 = vrot.slane %v67, %v127
    %v130 = vadd.f32 %v123, %v128
    %v132 = vlaneseq
    %v133 = vshrl.u32 %v132, 7
    %v134 = vsub.s32 0, %v133
    %v135 = vrot.slane %v68, %v134
    %v138 = vsel %vm94, %v130, 0
    %140 = vmatprep.subr.mxu0 0.0
    %141 = vmatpush1.msra.mxu0 0.0
    %142 = vmatprep.subr.mxu0 0.0
    %143 = vmatpush1.msra.mxu0 0.0
    %144 = vmatprep.subr.mxu0 0.0
    %145 = vmatpush1.msra.mxu0 0.0
    %146 = vmatprep.subr.mxu0 0.0
    %147 = vmatpush1.msra.mxu0 0.0
    %148 = vmatprep.subr.mxu0 0.0
    %149 = vmatpush1.msra.mxu0 0.0
    %150 = vmatprep.subr.mxu0 0.0
    %151 = vmatpush1.msra.mxu0 0.0
    %152 = vmatprep.subr.mxu0 0.0
    %153 = vmatpush1.msra.mxu0 0.0
    %154 = vmatprep.subr.mxu0 0.0
    %155 = vmatpush1.msra.mxu0 0.0
    %156 = vmatprep.subr.mxu0 0.0
    %157 = vmatpush1.msra.mxu0 0.0
    %158 = vmatprep.subr.mxu0 0.0
    %159 = vmatpush1.msra.mxu0 0.0
    %160 = vmatprep.subr.mxu0 0.0
    %161 = vmatpush1.msra.mxu0 0.0
    %162 = vmatprep.subr.mxu0 0.0
    %163 = vmatpush1.msra.mxu0 0.0
    %164 = vmatprep.subr.mxu0 0.0
    %165 = vmatpush1.msra.mxu0 %v75
    %166 = vmatprep.subr.mxu0 0.0
    %167 = vmatpush1.msra.mxu0 %v74
    %168 = vmatprep.subr.mxu0 0.0
    %169 = vmatpush1.msra.mxu0 %v73
    %170 = vmatprep.subr.mxu0 0.0
    %171 = vmatpush1.msra.mxu0 %v72
    %172 = vmatprep.subr.mxu0 0.0
    %173 = vmatpush2.msra.mxu0 0.0
    %174 = vmatprep.subr.mxu0 0.0
    %175 = vmatpush2.msra.mxu0 0.0
    %176 = vmatprep.subr.mxu0 0.0
    %177 = vmatpush2.msra.mxu0 0.0
    %178 = vmatprep.subr.mxu0 0.0
    %179 = vmatpush2.msra.mxu0 0.0
    %180 = vmatprep.subr.mxu0 0.0
    %181 = vmatpush2.msra.mxu0 0.0
    %182 = vmatprep.subr.mxu0 0.0
    %183 = vmatpush2.msra.mxu0 0.0
    %184 = vmatprep.subr.mxu0 0.0
    %185 = vmatpush2.msra.mxu0 0.0
    %186 = vmatprep.subr.mxu0 0.0
    %187 = vmatpush2.msra.mxu0 0.0
    %188 = vmatprep.subr.mxu0 0.0
    %189 = vmatpush2.msra.mxu0 0.0
    %190 = vmatprep.subr.mxu0 0.0
    %191 = vmatpush2.msra.mxu0 0.0
    %192 = vmatprep.subr.mxu0 0.0
    %193 = vmatpush2.msra.mxu0 0.0
    %194 = vmatprep.subr.mxu0 0.0
    %195 = vmatpush2.msra.mxu0 0.0
    %196 = vmatprep.subr.mxu0 0.0
    %197 = vmatpush2.msra.mxu0 0.0
    %198 = vmatprep.subr.mxu0 0.0
    %199 = vmatpush2.msra.mxu0 0.0
    %200 = vmatprep.subr.mxu0 0.0
    %201 = vmatpush2.msra.mxu0 0.0
    %202 = vmatprep.subr.mxu0 0.0
    %203 = vmatpush2.msra.mxu0 0.0
    %204 = vmatprep.mubr.f32.mxu0 0.0
    %205 = vmatmul.mubr.f32.gmra.mxu0 %v138
    %v206 = vpop.f32.mrf.mxu0
    %v207 = vadd.f32 %v135, %v206
    %v208 = vpop.f32.mrf.mxu0
    %209 = vdwg.mxu0
    %v210 = vmax.f32 %v207, 0.0
    %v211 = vld [vmem:[#allocation4] sm:$0xff]
    %vm212 = vcmask 64512
    %v214 = vsel %vm212, %v211, 0
    %216 = vmatprep.subr.mxu0 0.0
    %217 = vmatpush1.msra.mxu0 0.0
    %218 = vmatprep.subr.mxu0 0.0
    %219 = vmatpush1.msra.mxu0 0.0
    %220 = vmatprep.subr.mxu0 0.0
    %221 = vmatpush1.msra.mxu0 0.0
    %222 = vmatprep.subr.mxu0 0.0
    %223 = vmatpush1.msra.mxu0 0.0
    %224 = vmatprep.subr.mxu0 0.0
    %225 = vmatpush1.msra.mxu0 0.0
    %226 = vmatprep.subr.mxu0 0.0
    %227 = vmatpush1.msra.mxu0 0.0
    %228 = vmatprep.subr.mxu0 0.0
    %229 = vmatpush1.msra.mxu0 0.0
    %230 = vmatprep.subr.mxu0 0.0
    %231 = vmatpush1.msra.mxu0 0.0
    %232 = vmatprep.subr.mxu0 0.0
    %233 = vmatpush1.msra.mxu0 0.0
    %234 = vmatprep.subr.mxu0 0.0
    %235 = vmatpush1.msra.mxu0 0.0
    %236 = vmatprep.subr.mxu0 0.0
    %237 = vmatpush1.msra.mxu0 0.0
    %238 = vmatprep.subr.mxu0 0.0
    %239 = vmatpush1.msra.mxu0 0.0
    %240 = vmatprep.subr.mxu0 0.0
    %241 = vmatpush1.msra.mxu0 0.0
    %242 = vmatprep.subr.mxu0 0.0
    %243 = vmatpush1.msra.mxu0 0.0
    %244 = vmatprep.subr.mxu0 0.0
    %245 = vmatpush1.msra.mxu0 0.0
    %246 = vmatprep.subr.mxu0 0.0
    %247 = vmatpush1.msra.mxu0 %v92
    %248 = vmatprep.subr.mxu0 0.0
    %249 = vmatpush2.msra.mxu0 0.0
    %250 = vmatprep.subr.mxu0 0.0
    %251 = vmatpush2.msra.mxu0 0.0
    %252 = vmatprep.subr.mxu0 0.0
    %253 = vmatpush2.msra.mxu0 0.0
    %254 = vmatprep.subr.mxu0 0.0
    %255 = vmatpush2.msra.mxu0 0.0
    %256 = vmatprep.subr.mxu0 0.0
    %257 = vmatpush2.msra.mxu0 0.0
    %258 = vmatprep.subr.mxu0 0.0
    %259 = vmatpush2.msra.mxu0 0.0
    %260 = vmatprep.subr.mxu0 0.0
    %261 = vmatpush2.msra.mxu0 0.0
    %262 = vmatprep.subr.mxu0 0.0
    %263 = vmatpush2.msra.mxu0 0.0
    %264 = vmatprep.subr.mxu0 0.0
    %265 = vmatpush2.msra.mxu0 0.0
    %266 = vmatprep.subr.mxu0 0.0
    %267 = vmatpush2.msra.mxu0 0.0
    %268 = vmatprep.subr.mxu0 0.0
    %269 = vmatpush2.msra.mxu0 0.0
    %270 = vmatprep.subr.mxu0 0.0
    %271 = vmatpush2.msra.mxu0 0.0
    %272 = vmatprep.subr.mxu0 0.0
    %273 = vmatpush2.msra.mxu0 0.0
    %274 = vmatprep.subr.mxu0 0.0
    %275 = vmatpush2.msra.mxu0 0.0
    %276 = vmatprep.subr.mxu0 0.0
    %277 = vmatpush2.msra.mxu0 0.0
    %278 = vmatprep.subr.mxu0 0.0
    %279 = vmatpush2.msra.mxu0 0.0
    %280 = vmatprep.mubr.f32.mxu0 0.0
    %281 = vmatmul.mubr.f32.gmra.mxu0 %v214
    %v282 = vpop.f32.mrf.mxu0
    %v283 = vadd.f32 0.0, %v282
    %v284 = vpop.f32.mrf.mxu0
    %285 = vdwg.mxu0
    %286 = vmatprep.subr.mxu0 0.0
    %287 = vmatpush1.msra.mxu0 %v91
    %288 = vmatprep.subr.mxu0 0.0
    %289 = vmatpush1.msra.mxu0 %v90
    %290 = vmatprep.subr.mxu0 0.0
    %291 = vmatpush1.msra.mxu0 %v89
    %292 = vmatprep.subr.mxu0 0.0
    %293 = vmatpush1.msra.mxu0 %v88
    %294 = vmatprep.subr.mxu0 0.0
    %295 = vmatpush1.msra.mxu0 %v87
    %296 = vmatprep.subr.mxu0 0.0
    %297 = vmatpush1.msra.mxu0 %v86
    %298 = vmatprep.subr.mxu0 0.0
    %299 = vmatpush1.msra.mxu0 %v85
    %300 = vmatprep.subr.mxu0 0.0
    %301 = vmatpush1.msra.mxu0 %v84
    %302 = vmatprep.subr.mxu0 0.0
    %303 = vmatpush1.msra.mxu0 %v83
    %304 = vmatprep.subr.mxu0 0.0
    %305 = vmatpush1.msra.mxu0 %v82
    %306 = vmatprep.subr.mxu0 0.0
    %307 = vmatpush1.msra.mxu0 %v81
    %308 = vmatprep.subr.mxu0 0.0
    %309 = vmatpush1.msra.mxu0 %v80
    %310 = vmatprep.subr.mxu0 0.0
    %311 = vmatpush1.msra.mxu0 %v79
    %312 = vmatprep.subr.mxu0 0.0
    %313 = vmatpush1.msra.mxu0 %v78
    %314 = vmatprep.subr.mxu0 0.0
    %315 = vmatpush1.msra.mxu0 %v77
    %316 = vmatprep.subr.mxu0 0.0
    %317 = vmatpush1.msra.mxu0 %v76
    %318 = vmatprep.subr.mxu0 0.0
    %319 = vmatpush2.msra.mxu0 0.0
    %320 = vmatprep.subr.mxu0 0.0
    %321 = vmatpush2.msra.mxu0 0.0
    %322 = vmatprep.subr.mxu0 0.0
    %323 = vmatpush2.msra.mxu0 0.0
    %324 = vmatprep.subr.mxu0 0.0
    %325 = vmatpush2.msra.mxu0 0.0
    %326 = vmatprep.subr.mxu0 0.0
    %327 = vmatpush2.msra.mxu0 0.0
    %328 = vmatprep.subr.mxu0 0.0
    %329 = vmatpush2.msra.mxu0 0.0
    %330 = vmatprep.subr.mxu0 0.0
    %331 = vmatpush2.msra.mxu0 0.0
    %332 = vmatprep.subr.mxu0 0.0
    %333 = vmatpush2.msra.mxu0 0.0
    %334 = vmatprep.subr.mxu0 0.0
    %335 = vmatpush2.msra.mxu0 0.0
    %336 = vmatprep.subr.mxu0 0.0
    %337 = vmatpush2.msra.mxu0 0.0
    %338 = vmatprep.subr.mxu0 0.0
    %339 = vmatpush2.msra.mxu0 0.0
    %340 = vmatprep.subr.mxu0 0.0
    %341 = vmatpush2.msra.mxu0 0.0
    %342 = vmatprep.subr.mxu0 0.0
    %343 = vmatpush2.msra.mxu0 0.0
    %344 = vmatprep.subr.mxu0 0.0
    %345 = vmatpush2.msra.mxu0 0.0
    %346 = vmatprep.subr.mxu0 0.0
    %347 = vmatpush2.msra.mxu0 0.0
    %348 = vmatprep.subr.mxu0 0.0
    %349 = vmatpush2.msra.mxu0 0.0
    %350 = vmatprep.mubr.f32.mxu0 0.0
    %351 = vmatmul.mubr.f32.gmra.mxu0 %v210
    %v352 = vpop.f32.mrf.mxu0
    %v353 = vadd.f32 %v283, %v352
    %v354 = vpop.f32.mrf.mxu0
    %355 = vdwg.mxu0
    %v357 = vlaneseq
    %v358 = vshrl.u32 %v357, 7
    %v359 = vsub.s32 0, %v358
    %v360 = vrot.slane %v69, %v359
    %v362 = vadd.f32 %v353, %v360
    %v363 = vmax.f32 %v362, 0.0
    %v365 = vlaneseq
    %v366 = vshrl.u32 %v365, 7
    %v367 = vsub.s32 0, %v366
    %v368 = vrot.slane %v70, %v367
    %v370 = vmul.f32 %v363, %v368
    %vm371 = vcmask 523264
    %v372 = vsel %vm371, %v370, 0.0
    %373 = vadd.xlane.f32.xlu0 %v372
    %v374 = vpop.xlane.xlu0 %373
    %v376 = vlaneseq
    %v377 = vshrl.u32 %v376, 7
    %v378 = vsub.s32 0, %v377
    %v379 = vrot.slane %v71, %v378
    %v381 = vadd.f32 %v374, %v379
    %vm382 = vcmask 7168
    %383 = vst.msk [vmem:[%s4] sm:$0xff] %vm382, %v381
    // Predicated region
    $region34: #{tpu_custom_call.1} parent=1 // pred_check
      _
    $region35: #{tpu_custom_call.1} parent=1 // pred_check_branch
      %385 = sbr.rel (0) target = $region37
    $region36: #{tpu_custom_call.1} parent=1 // pred_region
      _
    $region37: #{tpu_custom_call.1} parent=1 // pred_fallthru
      _
    // Predicated region
    $region38: #{tpu_custom_call.1} parent=1 // pred_check
      _
    $region39: #{tpu_custom_call.1} parent=1 // pred_check_branch
      %387 = sbr.rel (0) target = $region41
    $region40: #{tpu_custom_call.1} parent=1 // pred_region
      _
    $region41: #{tpu_custom_call.1} parent=1 // pred_fallthru
      _
    %388 = vsyncpa [#allocation3], 1
    %389 = vsyncpa [#allocation5], 1
    %390 = vsyncpa [#allocation8], 1

</llo_original>
